<compile_context>
chip_gen: v5e
topology: v5e:2x2
jax: 0.10.0
libtpu: 0.0.40
codegen_flags: <defaults>
</compile_context>

<pallas_src>
import functools

import jax
import jax.numpy as jnp
from jax.experimental import pallas as pl
from jax.experimental.pallas import tpu as pltpu

THETA = 0.7  # central-difference strength of cdcconv


# ----------------------------- Pallas kernel ---------------------------------
def edge_block_kernel(x_ref, w0_ref, b0_ref, wf_ref, bf_ref, w2_ref, b2_ref,
                      o_ref, *, H, W, Cout):
    """Fused EdgeBlock for one image (grid is over the batch).

    x_ref  : (1, H, W*Cin)  lane-dense unpadded input (lane = w*Cin + ci)
    w*_ref : (3*W*Ci, W*Co) bf16 row-Toeplitz weights (W boundary taps zeroed)
    b*_ref : (1, W*Co)      f32 lane-tiled biases
    o_ref  : (1, H, W*Cout) lane-dense output
    """
    WC = W * Cout

    def conv3x3(a, w_ref, b_ref):
        # Row-im2col: lanes = [row i-1 | row i | row i+1] (zero at H borders),
        # then a single MXU matmul against the stacked Toeplitz weight.
        K = a.shape[-1]
        z = jnp.zeros((1, K), jnp.float32)
        up = jnp.concatenate([z, a[:H - 1]], axis=0)   # input row i-1
        dn = jnp.concatenate([a[1:], z], axis=0)       # input row i+1
        lhs = jnp.concatenate([up, a, dn], axis=1).astype(jnp.bfloat16)
        return jnp.dot(lhs, w_ref[...],
                       preferred_element_type=jnp.float32) + b_ref[...]

    x = x_ref[0].astype(jnp.float32)                   # (H, W*Cin)

    # ---- process: conv3x3(x) + bias -------------------------------------
    t = conv3x3(x, w0_ref, b0_ref)                     # (H, W*Cout)

    # ---- fused [Res-conv1 | CDC(folded)] over t --------------------------
    f = conv3x3(t, wf_ref, bf_ref)                     # (H, 2*W*Cout)
    u = jnp.maximum(f[:, :WC], 0.0)                    # ReLU(conv1(t) + b1)
    cdc = f[:, WC:]                                    # whole CDC branch

    # ---- Res-conv2 over u -------------------------------------------------
    r2 = conv3x3(u, w2_ref, b2_ref)                    # (H, W*Cout)

    o_ref[0] = (r2 + cdc).astype(o_ref.dtype)


# ----------------------- one-time weight preparation --------------------------
def _toeplitz(w, W):
    """(3, 3, Ci, Co) HWIO -> (3*W*Ci, W*Co) row-Toeplitz weight (no W halo).

    Entry [(dh, jin, ci), (j, co)] = w[dh, dw, ci, co] where jin = j + dw - 1,
    with out-of-range jin (the W boundary) left at zero (== SAME zero padding).
    """
    KH, KW, Ci, Co = w.shape
    wb = jnp.zeros((KH, W, Ci, W, Co), w.dtype)
    for dw in range(KW):
        e = jnp.eye(W, W, k=1 - dw, dtype=w.dtype)     # e[jin, j] = 1 iff jin == j + dw - 1
        wb = wb + w[:, dw][:, None, :, None, :] * e[None, :, None, :, None]
    return wb.reshape(KH * W * Ci, W * Co)


def prepare_edge_block_params(params, W):
    """Hoisted out of the forward path; call once and reuse."""
    wp, bp, w1, b1, w2, b2, wc = params
    Cout = wp.shape[-1]

    # Fold CDC's 1x1 branch into the centre tap of its 3x3 kernel:
    #   conv3x3(t, wc) - theta * (t @ wc.sum(0,1))  ==  conv3x3(t, wc_cd)
    wc_cd = wc.at[1, 1].add(-THETA * wc.sum(axis=(0, 1)))

    w0_big = _toeplitz(wp, W)                                        # (3*W*Cin,  W*Cout)
    wf_big = jnp.concatenate(                                        # (3*W*Cout, 2*W*Cout)
        [_toeplitz(w1, W).reshape(3, W * Cout, W * Cout),
         _toeplitz(wc_cd, W).reshape(3, W * Cout, W * Cout)],
        axis=-1).reshape(3 * W * Cout, 2 * W * Cout)
    w2_big = _toeplitz(w2, W)                                        # (3*W*Cout, W*Cout)

    b0_big = jnp.tile(bp, W).reshape(1, W * Cout)
    bf_big = jnp.concatenate(
        [jnp.tile(b1, W), jnp.zeros(W * Cout, b1.dtype)]).reshape(1, 2 * W * Cout)
    b2_big = jnp.tile(b2, W).reshape(1, W * Cout)

    # bf16 weights -> single-pass MXU + half the weight DMA; biases stay f32.
    return (w0_big.astype(jnp.bfloat16), b0_big,
            wf_big.astype(jnp.bfloat16), bf_big,
            w2_big.astype(jnp.bfloat16), b2_big)


# --------------------------------- forward ------------------------------------
@jax.jit
def edge_block(x_nchw, packed):
    """x_nchw: (N, Cin, H, W) float32; packed from prepare_edge_block_params."""
    w0, b0, wf, bf, w2, b2 = packed
    N, Cin, H, W = x_nchw.shape
    Cout = b0.shape[-1] // W

    # glue: NCHW -> NHWC, flatten (W, C) onto the lane axis (no padding needed)
    x_flat = jnp.transpose(x_nchw, (0, 2, 3, 1)).reshape(N, H, W * Cin)

    kernel = functools.partial(edge_block_kernel, H=H, W=W, Cout=Cout)
    resident2 = lambda n: (0, 0)   # weights/biases: same block every step

    out_flat = pl.pallas_call(
        kernel,
        out_shape=jax.ShapeDtypeStruct((N, H, W * Cout), jnp.float32),
        grid_spec=pltpu.PrefetchScalarGridSpec(
            num_scalar_prefetch=0,
            grid=(N,),
            in_specs=[
                pl.BlockSpec((1, H, W * Cin), lambda n: (n, 0, 0)),          # x
                pl.BlockSpec((3 * W * Cin, W * Cout), resident2),            # w0
                pl.BlockSpec((1, W * Cout), resident2),                      # b0
                pl.BlockSpec((3 * W * Cout, 2 * W * Cout), resident2),       # wf (w1 | wc_cd)
                pl.BlockSpec((1, 2 * W * Cout), resident2),                  # bf (b1 | 0)
                pl.BlockSpec((3 * W * Cout, W * Cout), resident2),           # w2
                pl.BlockSpec((1, W * Cout), resident2),                      # b2
            ],
            out_specs=pl.BlockSpec((1, H, W * Cout), lambda n: (n, 0, 0)),
        ),
        compiler_params=pltpu.CompilerParams(
            dimension_semantics=("parallel",)),   # v7x: batch split across TCs
    )(x_flat, w0, b0, wf, bf, w2, b2)

    out = out_flat.reshape(N, H, W, Cout)
    return jnp.transpose(out, (0, 3, 1, 2))  # back to NCHW


# ------------------------- pure-JAX reference --------------------------------
def _conv_ref(x_nhwc, w_hwio, b=None):
    y = jax.lax.conv_general_dilated(
        x_nhwc, w_hwio, (1, 1), "SAME",
        dimension_numbers=("NHWC", "HWIO", "NHWC"),
        precision=jax.lax.Precision.HIGHEST)
    if b is not None:
        y = y + b
    return y


def edge_block_ref(x_nchw, params):
    wp, bp, w1, b1, w2, b2, wc = params
    x = jnp.transpose(x_nchw, (0, 2, 3, 1))
    t = _conv_ref(x, wp, bp)
    res = _conv_ref(jax.nn.relu(_conv_ref(t, w1, b1)), w2, b2)
    cdc = _conv_ref(t, wc) - THETA * _conv_ref(t, wc.sum(axis=(0, 1))[None, None])
    out = res + cdc
    return jnp.transpose(out, (0, 3, 1, 2))


# ------------------------------- main ----------------------------------------
if __name__ == "__main__":
    key = jax.random.PRNGKey(0)
    N, Cin, Cout, H, W = 2, 4, 8, 16, 16   # W * Cout = 128 -> lane-dense output

    keys = jax.random.split(key, 8)
    x = jax.random.normal(keys[0], (N, Cin, H, W), jnp.float32)

    # deterministic synthetic parameters (HWIO layout)
    wp = 0.1 * jax.random.normal(keys[1], (3, 3, Cin, Cout), jnp.float32)
    bp = 0.1 * jax.random.normal(keys[2], (Cout,), jnp.float32)
    w1 = 0.1 * jax.random.normal(keys[3], (3, 3, Cout, Cout), jnp.float32)
    b1 = 0.1 * jax.random.normal(keys[4], (Cout,), jnp.float32)
    w2 = 0.1 * jax.random.normal(keys[5], (3, 3, Cout, Cout), jnp.float32)
    b2 = 0.1 * jax.random.normal(keys[6], (Cout,), jnp.float32)
    wc = 0.1 * jax.random.normal(keys[7], (3, 3, Cout, Cout), jnp.float32)  # CDC, bias=False
    params = (wp, bp, w1, b1, w2, b2, wc)

    packed = prepare_edge_block_params(params, W)   # one-time weight packing
    out = jax.block_until_ready(edge_block(x, packed))
    ref = jax.block_until_ready(edge_block_ref(x, params))

    assert out.shape == (N, Cout, H, W)
    max_err = float(jnp.max(jnp.abs(out - ref)))
    # Tolerance accounts for single-pass bf16 MXU (kernel) vs f32 HIGHEST (ref)
    # across three chained convs.
    assert jnp.allclose(out, ref, atol=2e-2, rtol=2e-2), max_err
    print("KERNEL_OK")
</pallas_src>

<mosaic_0001>
module attributes {stable_mosaic.version = 11 : i64} {
  func.func @edge_block_kernel(%arg0: i32, %arg1: memref<1x16x64xf32, #tpu.memory_space<vmem>>, %arg2: memref<192x128xbf16, #tpu.memory_space<vmem>>, %arg3: memref<1x128xf32, #tpu.memory_space<vmem>>, %arg4: memref<384x256xbf16, #tpu.memory_space<vmem>>, %arg5: memref<1x256xf32, #tpu.memory_space<vmem>>, %arg6: memref<384x128xbf16, #tpu.memory_space<vmem>>, %arg7: memref<1x128xf32, #tpu.memory_space<vmem>>, %arg8: memref<1x16x128xf32, #tpu.memory_space<vmem>>) attributes {dimension_semantics = [#tpu.dimension_semantics<parallel>], iteration_bounds = array<i64: 2>, scalar_prefetch = 0 : i64, scratch_operands = 0 : i64, tpu.core_type = #tpu.core_type<tc>, window_params = [{transform_indices = @transform_0, window_bounds = array<i64: 1, 16, 64>}, {pipeline_mode = #tpu.pipeline_mode<synchronous>, transform_indices = @transform_1, window_bounds = array<i64: 192, 128>}, {pipeline_mode = #tpu.pipeline_mode<synchronous>, transform_indices = @transform_2, window_bounds = array<i64: 1, 128>}, {pipeline_mode = #tpu.pipeline_mode<synchronous>, transform_indices = @transform_3, window_bounds = array<i64: 384, 256>}, {pipeline_mode = #tpu.pipeline_mode<synchronous>, transform_indices = @transform_4, window_bounds = array<i64: 1, 256>}, {pipeline_mode = #tpu.pipeline_mode<synchronous>, transform_indices = @transform_5, window_bounds = array<i64: 384, 128>}, {pipeline_mode = #tpu.pipeline_mode<synchronous>, transform_indices = @transform_6, window_bounds = array<i64: 1, 128>}, {transform_indices = @transform_7, window_bounds = array<i64: 1, 16, 128>}]} {
    %c0 = arith.constant 0 : index
    %c0_0 = arith.constant 0 : index
    %c0_1 = arith.constant 0 : index
    %0 = vector.load %arg1[%c0, %c0_0, %c0_1] : memref<1x16x64xf32, #tpu.memory_space<vmem>>, vector<1x16x64xf32>
    %1 = vector.shape_cast %0 : vector<1x16x64xf32> to vector<16x64xf32>
    %cst = arith.constant 0.000000e+00 : f32
    %2 = vector.broadcast %cst : f32 to vector<1x64xf32>
    %3 = vector.extract_strided_slice %1 {offsets = [0, 0], sizes = [15, 64], strides = [1, 1]} : vector<16x64xf32> to vector<15x64xf32>
    %4 = tpu.concatenate %2, %3 in 0 : vector<1x64xf32>, vector<15x64xf32> -> vector<16x64xf32>
    %5 = vector.extract_strided_slice %1 {offsets = [1, 0], sizes = [15, 64], strides = [1, 1]} : vector<16x64xf32> to vector<15x64xf32>
    %6 = tpu.concatenate %5, %2 in 0 : vector<15x64xf32>, vector<1x64xf32> -> vector<16x64xf32>
    %7 = tpu.concatenate %4, %1, %6 in 1 : vector<16x64xf32>, vector<16x64xf32>, vector<16x64xf32> -> vector<16x192xf32>
    %8 = arith.truncf %7 : vector<16x192xf32> to vector<16x192xbf16>
    %c0_2 = arith.constant 0 : index
    %c0_3 = arith.constant 0 : index
    %9 = vector.load %arg2[%c0_2, %c0_3] : memref<192x128xbf16, #tpu.memory_space<vmem>>, vector<192x128xbf16>
    %cst_4 = arith.constant dense<0.000000e+00> : vector<16x128xf32>
    %10 = tpu.matmul %8, %9, %cst_4 {dimension_numbers = #tpu.dot_dimension_numbers<[1], [0], [0], [1], [0, 0, 1, 1], [], []>} : vector<16x192xbf16>, vector<192x128xbf16>, vector<16x128xf32> -> vector<16x128xf32>
    %c0_5 = arith.constant 0 : index
    %c0_6 = arith.constant 0 : index
    %11 = vector.load %arg3[%c0_5, %c0_6] : memref<1x128xf32, #tpu.memory_space<vmem>>, vector<1x128xf32>
    %12 = vector.broadcast %11 : vector<1x128xf32> to vector<16x128xf32>
    %13 = arith.addf %10, %12 : vector<16x128xf32>
    %cst_7 = arith.constant 0.000000e+00 : f32
    %14 = vector.broadcast %cst_7 : f32 to vector<1x128xf32>
    %15 = vector.extract_strided_slice %13 {offsets = [0, 0], sizes = [15, 128], strides = [1, 1]} : vector<16x128xf32> to vector<15x128xf32>
    %16 = tpu.concatenate %14, %15 in 0 : vector<1x128xf32>, vector<15x128xf32> -> vector<16x128xf32>
    %17 = vector.extract_strided_slice %13 {offsets = [1, 0], sizes = [15, 128], strides = [1, 1]} : vector<16x128xf32> to vector<15x128xf32>
    %18 = tpu.concatenate %17, %14 in 0 : vector<15x128xf32>, vector<1x128xf32> -> vector<16x128xf32>
    %19 = tpu.concatenate %16, %13, %18 in 1 : vector<16x128xf32>, vector<16x128xf32>, vector<16x128xf32> -> vector<16x384xf32>
    %20 = arith.truncf %19 : vector<16x384xf32> to vector<16x384xbf16>
    %c0_8 = arith.constant 0 : index
    %c0_9 = arith.constant 0 : index
    %21 = vector.load %arg4[%c0_8, %c0_9] : memref<384x256xbf16, #tpu.memory_space<vmem>>, vector<384x256xbf16>
    %cst_10 = arith.constant dense<0.000000e+00> : vector<16x256xf32>
    %22 = tpu.matmul %20, %21, %cst_10 {dimension_numbers = #tpu.dot_dimension_numbers<[1], [0], [0], [1], [0, 0, 1, 1], [], []>} : vector<16x384xbf16>, vector<384x256xbf16>, vector<16x256xf32> -> vector<16x256xf32>
    %c0_11 = arith.constant 0 : index
    %c0_12 = arith.constant 0 : index
    %23 = vector.load %arg5[%c0_11, %c0_12] : memref<1x256xf32, #tpu.memory_space<vmem>>, vector<1x256xf32>
    %24 = vector.broadcast %23 : vector<1x256xf32> to vector<16x256xf32>
    %25 = arith.addf %22, %24 : vector<16x256xf32>
    %26 = vector.extract_strided_slice %25 {offsets = [0, 0], sizes = [16, 128], strides = [1, 1]} : vector<16x256xf32> to vector<16x128xf32>
    %cst_13 = arith.constant 0.000000e+00 : f32
    %27 = vector.broadcast %cst_13 : f32 to vector<16x128xf32>
    %28 = arith.maximumf %26, %27 : vector<16x128xf32>
    %29 = vector.extract_strided_slice %25 {offsets = [0, 128], sizes = [16, 128], strides = [1, 1]} : vector<16x256xf32> to vector<16x128xf32>
    %cst_14 = arith.constant 0.000000e+00 : f32
    %30 = vector.broadcast %cst_14 : f32 to vector<1x128xf32>
    %31 = vector.extract_strided_slice %28 {offsets = [0, 0], sizes = [15, 128], strides = [1, 1]} : vector<16x128xf32> to vector<15x128xf32>
    %32 = tpu.concatenate %30, %31 in 0 : vector<1x128xf32>, vector<15x128xf32> -> vector<16x128xf32>
    %33 = vector.extract_strided_slice %28 {offsets = [1, 0], sizes = [15, 128], strides = [1, 1]} : vector<16x128xf32> to vector<15x128xf32>
    %34 = tpu.concatenate %33, %30 in 0 : vector<15x128xf32>, vector<1x128xf32> -> vector<16x128xf32>
    %35 = tpu.concatenate %32, %28, %34 in 1 : vector<16x128xf32>, vector<16x128xf32>, vector<16x128xf32> -> vector<16x384xf32>
    %36 = arith.truncf %35 : vector<16x384xf32> to vector<16x384xbf16>
    %c0_15 = arith.constant 0 : index
    %c0_16 = arith.constant 0 : index
    %37 = vector.load %arg6[%c0_15, %c0_16] : memref<384x128xbf16, #tpu.memory_space<vmem>>, vector<384x128xbf16>
    %cst_17 = arith.constant dense<0.000000e+00> : vector<16x128xf32>
    %38 = tpu.matmul %36, %37, %cst_17 {dimension_numbers = #tpu.dot_dimension_numbers<[1], [0], [0], [1], [0, 0, 1, 1], [], []>} : vector<16x384xbf16>, vector<384x128xbf16>, vector<16x128xf32> -> vector<16x128xf32>
    %c0_18 = arith.constant 0 : index
    %c0_19 = arith.constant 0 : index
    %39 = vector.load %arg7[%c0_18, %c0_19] : memref<1x128xf32, #tpu.memory_space<vmem>>, vector<1x128xf32>
    %40 = vector.broadcast %39 : vector<1x128xf32> to vector<16x128xf32>
    %41 = arith.addf %38, %40 : vector<16x128xf32>
    %42 = arith.addf %41, %29 : vector<16x128xf32>
    %c0_20 = arith.constant 0 : index
    %c0_21 = arith.constant 0 : index
    %c0_22 = arith.constant 0 : index
    %43 = vector.load %arg8[%c0_20, %c0_21, %c0_22] : memref<1x16x128xf32, #tpu.memory_space<vmem>>, vector<1x16x128xf32>
    %44 = vector.shape_cast %43 : vector<1x16x128xf32> to vector<16x128xf32>
    %45 = vector.shape_cast %42 : vector<16x128xf32> to vector<1x16x128xf32>
    tpu.vector_store %arg8[%c0_20, %c0_21, %c0_22], %45 {strides = array<i32>} : memref<1x16x128xf32, #tpu.memory_space<vmem>>, vector<1x16x128xf32>,
    return
  }
  func.func @transform_0(%arg0: i32) -> (i32, i32, i32) {
    %c0_i32 = arith.constant 0 : i32
    %c0_i32_0 = arith.constant 0 : i32
    %c0_i32_1 = arith.constant 0 : i32
    return %arg0, %c0_i32, %c0_i32_0 : i32, i32, i32
  }
  func.func @transform_1(%arg0: i32) -> (i32, i32) {
    %c0_i32 = arith.constant 0 : i32
    %c0_i32_0 = arith.constant 0 : i32
    %c0_i32_1 = arith.constant 0 : i32
    return %c0_i32, %c0_i32_0 : i32, i32
  }
  func.func @transform_2(%arg0: i32) -> (i32, i32) {
    %c0_i32 = arith.constant 0 : i32
    %c0_i32_0 = arith.constant 0 : i32
    %c0_i32_1 = arith.constant 0 : i32
    return %c0_i32, %c0_i32_0 : i32, i32
  }
  func.func @transform_3(%arg0: i32) -> (i32, i32) {
    %c0_i32 = arith.constant 0 : i32
    %c0_i32_0 = arith.constant 0 : i32
    %c0_i32_1 = arith.constant 0 : i32
    return %c0_i32, %c0_i32_0 : i32, i32
  }
  func.func @transform_4(%arg0: i32) -> (i32, i32) {
    %c0_i32 = arith.constant 0 : i32
    %c0_i32_0 = arith.constant 0 : i32
    %c0_i32_1 = arith.constant 0 : i32
    return %c0_i32, %c0_i32_0 : i32, i32
  }
  func.func @transform_5(%arg0: i32) -> (i32, i32) {
    %c0_i32 = arith.constant 0 : i32
    %c0_i32_0 = arith.constant 0 : i32
    %c0_i32_1 = arith.constant 0 : i32
    return %c0_i32, %c0_i32_0 : i32, i32
  }
  func.func @transform_6(%arg0: i32) -> (i32, i32) {
    %c0_i32 = arith.constant 0 : i32
    %c0_i32_0 = arith.constant 0 : i32
    %c0_i32_1 = arith.constant 0 : i32
    return %c0_i32, %c0_i32_0 : i32, i32
  }
  func.func @transform_7(%arg0: i32) -> (i32, i32, i32) {
    %c0_i32 = arith.constant 0 : i32
    %c0_i32_0 = arith.constant 0 : i32
    %c0_i32_1 = arith.constant 0 : i32
    return %arg0, %c0_i32, %c0_i32_0 : i32, i32, i32
  }
}

</mosaic_0001>

<llo_original>
// kernel: edge_block.1
$region0: #{edge_block.1}
  #allocation0 [shape = 'u32[]', space=smem, size = 0x4, offset = 0x4, fixed_abs, tag = 'smem constant byte address 0x4 - core index']
  #allocation1 [shape = 'u32[72,128]{1,0:T(1,128)}', space=vmem, size = 0x9000, scoped, tag = 'internal scratch']
  %s0 = inlined_call_operand.vmem [shape: f32[2,16,64], index: 0, kind: input, shape index: {}]
  %s1 = inlined_call_operand.hbm [shape: bf16[192,128], index: 1, kind: input, shape index: {}]
  %s2 = inlined_call_operand.vmem [shape: f32[1,128], index: 2, kind: input, shape index: {}]
  %s3 = inlined_call_operand.vmem [shape: bf16[384,256], index: 3, kind: input, shape index: {}]
  %s4 = inlined_call_operand.vmem [shape: f32[1,256], index: 4, kind: input, shape index: {}]
  %s5 = inlined_call_operand.hbm [shape: bf16[384,128], index: 5, kind: input, shape index: {}]
  %s6 = inlined_call_operand.vmem [shape: f32[1,128], index: 6, kind: input, shape index: {}]
  %s7 = inlined_call_operand.vmem [shape: f32[2,16,128], index: 7, kind: output, shape index: {}]
  %s8 = sld [smem:[#allocation0]]
  $region69: #{edge_block.1} parent=0
    _
  %s10 = ssub.s32 1, %s8
  %s11 = scalar_select 0, %s10, %s8
  $region1: #{edge_block.1} parent=0
    #allocation2 [shape = 'u8[49152]{0}', space=vmem, size = 0xc000, scoped, tag = 'input window, operand 1, single buffered']
    #allocation3 [shape = 's32[2]{0}', space=sflag, size = 0x8, scoped, tag = 'scoped memory for edge_block.1']
    #allocation4 [shape = 'u8[98304]{0}', space=vmem, size = 0x18000, scoped, tag = 'input window, operand 5, single buffered']
    #allocation5 [shape = 's32[1]{0}', space=sflag, size = 0x4, scoped, tag = 'scoped memory for edge_block.1']
    %12 = vsyncpa [#allocation3], 0
    %13 = vsyncpa [#allocation5], 0
    loop: start=0, step=1, limit=4
    $region2: #{edge_block.1} parent=1 // loop_pre_header
      _
    $region3: #{edge_block.1} parent=1 // loop_header
      %s15 = sphi 0, %s19
      %p16 = scmp.ge.s32.totalorder %s15, 4
      %s25 = sphi 0, %s27
      %s28 = sphi 0, %s25
      %s29 = sphi 0, %s28
      %s45 = sphi 0, %s29
      %s49 = sphi 0, %s49
      %s51 = sphi 0, %s49
      %s52 = sphi 0, %s51
      %s66 = sphi 0, %s52
      %s70 = sphi 0, %s70
      %s72 = sphi 0, %s70
      %s73 = sphi 0, %s72
      %s87 = sphi 0, %s73
      %s91 = sphi 0, %s91
      %s93 = sphi 0, %s91
      %s94 = sphi 0, %s93
      %s108 = sphi 0, %s94
      %s112 = sphi 0, %s112
      %s114 = sphi 0, %s112
      %s115 = sphi 0, %s114
      %s129 = sphi 0, %s115
      %s133 = sphi 0, %s133
      %s135 = sphi 0, %s133
      %s136 = sphi 0, %s135
      %s150 = sphi 0, %s136
      %s154 = sphi 0, %s154
      %s156 = sphi 0, %s154
      %s157 = sphi 0, %s156
      %s171 = sphi 0, %s157
      %s177 = sphi 0, %s179
      %s180 = sphi 0, %s177
      %s181 = sphi 0, %s180
      %s197 = sphi 0, %s181
    $region4: #{edge_block.1} parent=1 // loop_header_branch
      %18 = sbr.rel (%p16) target = $region8
    $region5: #{edge_block.1} parent=1 // loop_body
      %s20 = ssub.s32 %s15, 1
      %s21 = ssub.s32 %s15, 2
      %s22 = sadd.s32 %s15, 1
      %s23 = ssub.s32 %s15, %s22
      %p24 = scmp.eq.s32.totalorder %s23, 0
      %s26 = sadd.s32 %s25, 1
      %s27 = scalar_select %p24, %s25, %s26
      %p30 = pneg %p24
      %p31 = scmp.eq.s32.totalorder %s15, 1
      %p32 = por %p30, %p31
      %p33 = scmp.ne.s32.totalorder %s25, %s28
      %p34 = scmp.eq.s32.totalorder %s15, 0
      %p35 = por %p33, %p34
      %p36 = scmp.ne.s32.totalorder %s25, %s28
      %p37 = scmp.eq.s32.totalorder %s20, 1
      %p38 = por %p36, %p37
      %p39 = scmp.ne.s32.totalorder %s28, %s29
      %p40 = scmp.eq.s32.totalorder %s20, 0
      %p41 = por %p39, %p40
      %p42 = scmp.ne.s32.totalorder %s28, %s29
      %p43 = scmp.eq.s32.totalorder %s21, 1
      %p44 = por %p42, %p43
      %p46 = scmp.ne.s32.totalorder %s29, %s45
      %p47 = scmp.eq.s32.totalorder %s21, 0
      %p48 = por %p46, %p47
      %s50 = sadd.s32 %s49, 1
      %p53 = scmp.eq.s32.totalorder %s15, 1
      %p54 = scmp.ne.s32.totalorder %s49, %s51
      %p55 = scmp.eq.s32.totalorder %s15, 0
      %p56 = por %p54, %p55
      %p57 = scmp.ne.s32.totalorder %s49, %s51
      %p58 = scmp.eq.s32.totalorder %s20, 1
      %p59 = por %p57, %p58
      %p60 = scmp.ne.s32.totalorder %s51, %s52
      %p61 = scmp.eq.s32.totalorder %s20, 0
      %p62 = por %p60, %p61
      %p63 = scmp.ne.s32.totalorder %s51, %s52
      %p64 = scmp.eq.s32.totalorder %s21, 1
      %p65 = por %p63, %p64
      %p67 = scmp.ne.s32.totalorder %s52, %s66
      %p68 = scmp.eq.s32.totalorder %s21, 0
      %p69 = por %p67, %p68
      %s71 = sadd.s32 %s70, 1
      %p74 = scmp.eq.s32.totalorder %s15, 1
      %p75 = scmp.ne.s32.totalorder %s70, %s72
      %p76 = scmp.eq.s32.totalorder %s15, 0
      %p77 = por %p75, %p76
      %p78 = scmp.ne.s32.totalorder %s70, %s72
      %p79 = scmp.eq.s32.totalorder %s20, 1
      %p80 = por %p78, %p79
      %p81 = scmp.ne.s32.totalorder %s72, %s73
      %p82 = scmp.eq.s32.totalorder %s20, 0
      %p83 = por %p81, %p82
      %p84 = scmp.ne.s32.totalorder %s72, %s73
      %p85 = scmp.eq.s32.totalorder %s21, 1
      %p86 = por %p84, %p85
      %p88 = scmp.ne.s32.totalorder %s73, %s87
      %p89 = scmp.eq.s32.totalorder %s21, 0
      %p90 = por %p88, %p89
      %s92 = sadd.s32 %s91, 1
      %p95 = scmp.eq.s32.totalorder %s15, 1
      %p96 = scmp.ne.s32.totalorder %s91, %s93
      %p97 = scmp.eq.s32.totalorder %s15, 0
      %p98 = por %p96, %p97
      %p99 = scmp.ne.s32.totalorder %s91, %s93
      %p100 = scmp.eq.s32.totalorder %s20, 1
      %p101 = por %p99, %p100
      %p102 = scmp.ne.s32.totalorder %s93, %s94
      %p103 = scmp.eq.s32.totalorder %s20, 0
      %p104 = por %p102, %p103
      %p105 = scmp.ne.s32.totalorder %s93, %s94
      %p106 = scmp.eq.s32.totalorder %s21, 1
      %p107 = por %p105, %p106
      %p109 = scmp.ne.s32.totalorder %s94, %s108
      %p110 = scmp.eq.s32.totalorder %s21, 0
      %p111 = por %p109, %p110
      %s113 = sadd.s32 %s112, 1
      %p116 = scmp.eq.s32.totalorder %s15, 1
      %p117 = scmp.ne.s32.totalorder %s112, %s114
      %p118 = scmp.eq.s32.totalorder %s15, 0
      %p119 = por %p117, %p118
      %p120 = scmp.ne.s32.totalorder %s112, %s114
      %p121 = scmp.eq.s32.totalorder %s20, 1
      %p122 = por %p120, %p121
      %p123 = scmp.ne.s32.totalorder %s114, %s115
      %p124 = scmp.eq.s32.totalorder %s20, 0
      %p125 = por %p123, %p124
      %p126 = scmp.ne.s32.totalorder %s114, %s115
      %p127 = scmp.eq.s32.totalorder %s21, 1
      %p128 = por %p126, %p127
      %p130 = scmp.ne.s32.totalorder %s115, %s129
      %p131 = scmp.eq.s32.totalorder %s21, 0
      %p132 = por %p130, %p131
      %s134 = sadd.s32 %s133, 1
      %p137 = scmp.eq.s32.totalorder %s15, 1
      %p138 = scmp.ne.s32.totalorder %s133, %s135
      %p139 = scmp.eq.s32.totalorder %s15, 0
      %p140 = por %p138, %p139
      %p141 = scmp.ne.s32.totalorder %s133, %s135
      %p142 = scmp.eq.s32.totalorder %s20, 1
      %p143 = por %p141, %p142
      %p144 = scmp.ne.s32.totalorder %s135, %s136
      %p145 = scmp.eq.s32.totalorder %s20, 0
      %p146 = por %p144, %p145
      %p147 = scmp.ne.s32.totalorder %s135, %s136
      %p148 = scmp.eq.s32.totalorder %s21, 1
      %p149 = por %p147, %p148
      %p151 = scmp.ne.s32.totalorder %s136, %s150
      %p152 = scmp.eq.s32.totalorder %s21, 0
      %p153 = por %p151, %p152
      %s155 = sadd.s32 %s154, 1
      %p158 = scmp.eq.s32.totalorder %s15, 1
      %p159 = scmp.ne.s32.totalorder %s154, %s156
      %p160 = scmp.eq.s32.totalorder %s15, 0
      %p161 = por %p159, %p160
      %p162 = scmp.ne.s32.totalorder %s154, %s156
      %p163 = scmp.eq.s32.totalorder %s20, 1
      %p164 = por %p162, %p163
      %p165 = scmp.ne.s32.totalorder %s156, %s157
      %p166 = scmp.eq.s32.totalorder %s20, 0
      %p167 = por %p165, %p166
      %p168 = scmp.ne.s32.totalorder %s156, %s157
      %p169 = scmp.eq.s32.totalorder %s21, 1
      %p170 = por %p168, %p169
      %p172 = scmp.ne.s32.totalorder %s157, %s171
      %p173 = scmp.eq.s32.totalorder %s21, 0
      %p174 = por %p172, %p173
      %s175 = ssub.s32 %s15, %s22
      %p176 = scmp.eq.s32.totalorder %s175, 0
      %s178 = sadd.s32 %s177, 1
      %s179 = scalar_select %p176, %s177, %s178
      %p182 = pneg %p176
      %p183 = scmp.eq.s32.totalorder %s15, 1
      %p184 = por %p182, %p183
      %p185 = scmp.ne.s32.totalorder %s177, %s180
      %p186 = scmp.eq.s32.totalorder %s15, 0
      %p187 = por %p185, %p186
      %p188 = scmp.ne.s32.totalorder %s177, %s180
      %p189 = scmp.eq.s32.totalorder %s20, 1
      %p190 = por %p188, %p189
      %p191 = scmp.ne.s32.totalorder %s180, %s181
      %p192 = scmp.eq.s32.totalorder %s20, 0
      %p193 = por %p191, %p192
      %p194 = scmp.ne.s32.totalorder %s180, %s181
      %p195 = scmp.eq.s32.totalorder %s21, 1
      %p196 = por %p194, %p195
      %p198 = scmp.ne.s32.totalorder %s181, %s197
      %p199 = scmp.eq.s32.totalorder %s21, 0
      %p200 = por %p198, %p199
      %p201 = scmp.le.s32.totalorder 1, %s15
      %p202 = scmp.lt.s32.totalorder %s15, 3
      %p203 = pnand %p201, %p202
      %p204 = pneg %p203
      // Predicated region
      $region9: #{edge_block.1} parent=5 // pred_check
        _
      $region10: #{edge_block.1} parent=5 // pred_check_branch
        %206 = sbr.rel (%p203) target = $region12
      $region11: #{edge_block.1} parent=5 // pred_region
        %s207 = ssub.s32 %s15, 1
        // Predicated region
        $region13: #{edge_block.1} parent=11 // pred_check
          %p208 = pneg %p62
        $region14: #{edge_block.1} parent=11 // pred_check_branch
          %210 = sbr.rel (%p208) target = $region16
        $region15: #{edge_block.1} parent=11 // pred_region
          %212 = vsyncadd [#allocation3], 0
          %s213 = sshll.u32 %s1, 4
          %s214 = int_to_ptr.hbm [resolvable:$true] %s213
          %s215 = sshll.u32 [#allocation2], 4
          %s216 = int_to_ptr.vmem [resolvable:$true] %s215
          %221 = dma.hbm_to_vmem [thread:$0]  %s214, 1536, %s216, [#allocation3], 64, 64, 4
        $region16: #{edge_block.1} parent=11 // pred_fallthru
          _
        // Predicated region
        $region17: #{edge_block.1} parent=11 // pred_check
          %p222 = pneg %p83
        $region18: #{edge_block.1} parent=11 // pred_check_branch
          %224 = sbr.rel (%p222) target = $region20
        $region19: #{edge_block.1} parent=11 // pred_region
          _
        $region20: #{edge_block.1} parent=11 // pred_fallthru
          _
        // Predicated region
        $region21: #{edge_block.1} parent=11 // pred_check
          %p225 = pneg %p104
        $region22: #{edge_block.1} parent=11 // pred_check_branch
          %227 = sbr.rel (%p225) target = $region24
        $region23: #{edge_block.1} parent=11 // pred_region
          _
        $region24: #{edge_block.1} parent=11 // pred_fallthru
          _
        // Predicated region
        $region25: #{edge_block.1} parent=11 // pred_check
          %p228 = pneg %p125
        $region26: #{edge_block.1} parent=11 // pred_check_branch
          %230 = sbr.rel (%p228) target = $region28
        $region27: #{edge_block.1} parent=11 // pred_region
          _
        $region28: #{edge_block.1} parent=11 // pred_fallthru
          _
        // Predicated region
        $region29: #{edge_block.1} parent=11 // pred_check
          %p231 = pneg %p146
        $region30: #{edge_block.1} parent=11 // pred_check_branch
          %233 = sbr.rel (%p231) target = $region32
        $region31: #{edge_block.1} parent=11 // pred_region
          %235 = vsyncadd [#allocation5], 0
          %s236 = sshll.u32 %s5, 4
          %s237 = int_to_ptr.hbm [resolvable:$true] %s236
          %s238 = sshll.u32 [#allocation4], 4
          %s239 = int_to_ptr.vmem [resolvable:$true] %s238
          %244 = dma.hbm_to_vmem [thread:$0]  %s237, 3072, %s239, [#allocation5], 64, 64, 4
        $region32: #{edge_block.1} parent=11 // pred_fallthru
          _
        // Predicated region
        $region33: #{edge_block.1} parent=11 // pred_check
          %p245 = pneg %p167
        $region34: #{edge_block.1} parent=11 // pred_check_branch
          %247 = sbr.rel (%p245) target = $region36
        $region35: #{edge_block.1} parent=11 // pred_region
          _
        $region36: #{edge_block.1} parent=11 // pred_fallthru
          _
      $region12: #{edge_block.1} parent=5 // pred_fallthru
        _
      %p248 = scmp.lt.s32.totalorder %s15, 2
      // Predicated region
      $region37: #{edge_block.1} parent=5 // pred_check
        %p249 = pneg %p248
      $region38: #{edge_block.1} parent=5 // pred_check_branch
        %251 = sbr.rel (%p249) target = $region40
      $region39: #{edge_block.1} parent=5 // pred_region
        // Predicated region
        $region41: #{edge_block.1} parent=39 // pred_check
          %p252 = pneg %p35
        $region42: #{edge_block.1} parent=39 // pred_check_branch
          %254 = sbr.rel (%p252) target = $region44
        $region43: #{edge_block.1} parent=39 // pred_region
          %p255 = scmp.lt.s32.totalorder %s15, 1
          %s256 = scalar_select %p255, %s15, 1
          %s257 = smul.addr %s256, 2
          %s258 = smul.addr %s257, 8
          %s259 = scalar_lea.vmem %s0, %s258
        $region44: #{edge_block.1} parent=39 // pred_fallthru
          _
      $region40: #{edge_block.1} parent=5 // pred_fallthru
        _
      %p260 = scmp.le.s32.totalorder 1, %s15
      %p261 = scmp.lt.s32.totalorder %s15, 3
      %p262 = pnand %p260, %p261
      %p263 = pneg %p262
      // Predicated region
      $region45: #{edge_block.1} parent=5 // pred_check
        _
      $region46: #{edge_block.1} parent=5 // pred_check_branch
        %265 = sbr.rel (%p262) target = $region48
      $region47: #{edge_block.1} parent=5 // pred_region
        %s266 = ssub.s32 %s15, 1
        // Predicated region
        $region49: #{edge_block.1} parent=47 // pred_check
          %p267 = pneg %p62
        $region50: #{edge_block.1} parent=47 // pred_check_branch
          %269 = sbr.rel (%p267) target = $region52
        $region51: #{edge_block.1} parent=47 // pred_region
          %271 = dma.done [#allocation3], 1536
        $region52: #{edge_block.1} parent=47 // pred_fallthru
          _
        // Predicated region
        $region53: #{edge_block.1} parent=47 // pred_check
          %p272 = pneg %p146
        $region54: #{edge_block.1} parent=47 // pred_check_branch
          %274 = sbr.rel (%p272) target = $region56
        $region55: #{edge_block.1} parent=47 // pred_region
          %276 = dma.done [#allocation5], 3072
        $region56: #{edge_block.1} parent=47 // pred_fallthru
          _
        %p277 = scmp.lt.s32.totalorder %s20, 1
        %s278 = scalar_select %p277, %s20, 1
        %s279 = smul.addr %s278, 2
        %s280 = smul.addr %s279, 8
        %s281 = scalar_lea.vmem %s0, %s280
        %p282 = pneg %p41
        %p283 = pneg %p38
        %p284 = pneg %p62
        %p285 = pneg %p59
        %p286 = pneg %p83
        %p287 = pneg %p80
        %p288 = pneg %p104
        %p289 = pneg %p101
        %p290 = pneg %p125
        %p291 = pneg %p122
        %p292 = pneg %p146
        %p293 = pneg %p143
        %p294 = pneg %p167
        %p295 = pneg %p164
        %p296 = pneg %p193
        %p297 = pneg %p190
        %p298 = scmp.lt.s32.totalorder %s20, 1
        %s299 = scalar_select %p298, %s20, 1
        %s300 = smul.addr %s299, 2
        %s301 = smul.addr %s300, 8
        %s302 = scalar_lea.vmem %s7, %s301
        %p303 = scmp.lt.s32.totalorder %s20, 1
        %s304 = scalar_select %p303, %s20, 1
        %s305 = smul.addr %s304, 2
        %s306 = smul.addr %s305, 8
        %s307 = scalar_lea.vmem %s0, %s306
        %p308 = scmp.lt.s32.totalorder %s20, 1
        %s309 = scalar_select %p308, %s20, 1
        %s310 = smul.addr %s309, 2
        %s311 = smul.addr %s310, 8
        %s312 = scalar_lea.vmem %s7, %s311
        %v314 = vld [vmem:[%s307] sm:$0xff]
        %v315 = vld [vmem:[%s307 + $0x8] sm:$0xff]
        %vm318 = vcmask 1040384
        %v319 = vrot.slane %v314, 7
        %v320 = vrot.slane %v315, 7
        %v321 = vsel %vm318, %v319, %v320
        %v324 = vsel %vm318, 0.0, %v319
        %vm325 = vcmask 1046528
        %v326 = vrot.slane %v314, 1
        %v327 = vrot.slane %v315, 1
        %v328 = vsel %vm325, %v326, %v327
        %v331 = vsel %vm325, %v327, 0.0
        %332 = vrot.lane.b32.xlu0 %v314, 64
        %v333 = vpop.permute.xlu0 %332
        %334 = vrot.lane.b32.xlu0 %v315, 64
        %v335 = vpop.permute.xlu0 %334
        %vm338 = vcmask 523264
        %v339 = vsel %vm338, %v324, %v333
        %v340 = vsel %vm338, %v321, %v335
        %v341 = vpack.c.bf16 %v340, %v339
        %v342 = vpack.c.bf16 %v331, %v328
        %v343 = vld [vmem:[#allocation2] sm:$0xf]
        %v344 = vld [vmem:[#allocation2 + $0x4] sm:$0xf]
        %v345 = vld [vmem:[#allocation2 + $0x8] sm:$0xf]
        %v346 = vld [vmem:[#allocation2 + $0xc] sm:$0xf]
        %v347 = vld [vmem:[#allocation2 + $0x10] sm:$0xf]
        %v348 = vld [vmem:[#allocation2 + $0x14] sm:$0xf]
        %v349 = vld [vmem:[#allocation2 + $0x18] sm:$0xf]
        %v350 = vld [vmem:[#allocation2 + $0x1c] sm:$0xf]
        %v351 = vld [vmem:[#allocation2 + $0x20] sm:$0xf]
        %v352 = vld [vmem:[#allocation2 + $0x24] sm:$0xf]
        %v353 = vld [vmem:[#allocation2 + $0x28] sm:$0xf]
        %v354 = vld [vmem:[#allocation2 + $0x2c] sm:$0xf]
        %v355 = vld [vmem:[#allocation2 + $0x30] sm:$0xf]
        %v356 = vld [vmem:[#allocation2 + $0x34] sm:$0xf]
        %v357 = vld [vmem:[#allocation2 + $0x38] sm:$0xf]
        %v358 = vld [vmem:[#allocation2 + $0x3c] sm:$0xf]
        %v359 = vld [vmem:[#allocation2 + $0x40] sm:$0xf]
        %v360 = vld [vmem:[#allocation2 + $0x44] sm:$0xf]
        %v361 = vld [vmem:[#allocation2 + $0x48] sm:$0xf]
        %v362 = vld [vmem:[#allocation2 + $0x4c] sm:$0xf]
        %v363 = vld [vmem:[#allocation2 + $0x50] sm:$0xf]
        %v364 = vld [vmem:[#allocation2 + $0x54] sm:$0xf]
        %v365 = vld [vmem:[#allocation2 + $0x58] sm:$0xf]
        %v366 = vld [vmem:[#allocation2 + $0x5c] sm:$0xf]
        %v367 = vld [vmem:[%s2] sm:$0x1]
        %v369 = vperm.slane %v367, 0
        %v395 = vunpack.c.l.b16 %v343
        %v396 = vunpack.c.l.b16 %v344
        %v397 = vunpack.c.l.b16 %v345
        %v398 = vunpack.c.l.b16 %v346
        %v399 = vunpack.c.l.b16 %v347
        %v400 = vunpack.c.l.b16 %v348
        %v401 = vunpack.c.l.b16 %v349
        %v402 = vunpack.c.l.b16 %v350
        %v403 = vunpack.c.l.b16 %v351
        %v404 = vunpack.c.l.b16 %v352
        %v405 = vunpack.c.l.b16 %v353
        %v406 = vunpack.c.l.b16 %v354
        %v407 = vunpack.c.l.b16 %v355
        %v408 = vunpack.c.l.b16 %v356
        %v409 = vunpack.c.l.b16 %v357
        %v410 = vunpack.c.l.b16 %v358
        %v411 = vunpack.c.l.b16 %v359
        %v412 = vunpack.c.l.b16 %v360
        %v413 = vunpack.c.l.b16 %v361
        %v414 = vunpack.c.l.b16 %v362
        %v415 = vunpack.c.l.b16 %v363
        %v416 = vunpack.c.l.b16 %v364
        %v417 = vunpack.c.l.b16 %v365
        %v418 = vunpack.c.l.b16 %v366
        %v419 = vpack.c.b16 %v396, %v395
        %v420 = vpack.c.b16 %v398, %v397
        %v421 = vpack.c.b16 %v400, %v399
        %v422 = vpack.c.b16 %v402, %v401
        %v423 = vpack.c.b16 %v404, %v403
        %v424 = vpack.c.b16 %v406, %v405
        %v425 = vpack.c.b16 %v408, %v407
        %v426 = vpack.c.b16 %v410, %v409
        %v427 = vpack.c.b16 %v412, %v411
        %v428 = vpack.c.b16 %v414, %v413
        %v429 = vpack.c.b16 %v416, %v415
        %v430 = vpack.c.b16 %v418, %v417
        %v444 = vsel %vm338, %v342, 0
        %446 = vmatpush.bf16.msra.mxu0 %v426
        %447 = vmatpush.bf16.msra.mxu0 %v425
        %448 = vmatpush.bf16.msra.mxu0 %v424
        %449 = vmatpush.bf16.msra.mxu0 %v423
        %450 = vmatpush.bf16.msra.mxu0 %v422
        %451 = vmatpush.bf16.msra.mxu0 %v421
        %452 = vmatpush.bf16.msra.mxu0 %v420
        %453 = vmatpush.bf16.msra.mxu0 %v419
        %454 = vmatmul.bf16.gmra.mxu0 %v341
        %v455 = vpop.f32.mrf.mxu0
        %v456 = vadd.f32 %v369, %v455
        %v457 = vpop.f32.mrf.mxu0
        %v458 = vadd.f32 %v369, %v457
        %459 = vdwg.mxu0
        %460 = vmatpush.bf16.msra.mxu0 0
        %461 = vmatpush.bf16.msra.mxu0 0
        %462 = vmatpush.bf16.msra.mxu0 0
        %463 = vmatpush.bf16.msra.mxu0 0
        %464 = vmatpush.bf16.msra.mxu0 %v430
        %465 = vmatpush.bf16.msra.mxu0 %v429
        %466 = vmatpush.bf16.msra.mxu0 %v428
        %467 = vmatpush.bf16.msra.mxu0 %v427
        %468 = vmatmul.bf16.gmra.mxu0 %v444
        %v469 = vpop.f32.mrf.mxu0
        %v470 = vadd.f32 %v456, %v469
        %v471 = vpop.f32.mrf.mxu0
        %v472 = vadd.f32 %v458, %v471
        %473 = vdwg.mxu0
        %v476 = vrot.slane %v470, 7
        %v477 = vrot.slane %v472, 7
        %v478 = vsel %vm318, %v476, %v477
        %v481 = vsel %vm318, 0.0, %v476
        %v482 = vrot.slane %v470, 1
        %v483 = vrot.slane %v472, 1
        %v484 = vsel %vm325, %v482, %v483
        %v487 = vsel %vm325, %v483, 0.0
        %v488 = vpack.c.bf16 %v478, %v481
        %v489 = vpack.c.bf16 %v472, %v470
        %v490 = vpack.c.bf16 %v487, %v484
        %v491 = vld [vmem:[%s3] sm:$0xff]
        %v492 = vld [vmem:[%s3 + $0x8] sm:$0xff]
        %v493 = vld [vmem:[%s3 + $0x10] sm:$0xff]
        %v494 = vld [vmem:[%s3 + $0x18] sm:$0xff]
        %v495 = vld [vmem:[%s3 + $0x20] sm:$0xff]
        %v496 = vld [vmem:[%s3 + $0x28] sm:$0xff]
        %v497 = vld [vmem:[%s3 + $0x30] sm:$0xff]
        %v498 = vld [vmem:[%s3 + $0x38] sm:$0xff]
        %v499 = vld [vmem:[%s3 + $0x40] sm:$0xff]
        %v500 = vld [vmem:[%s3 + $0x48] sm:$0xff]
        %v501 = vld [vmem:[%s3 + $0x50] sm:$0xff]
        %v502 = vld [vmem:[%s3 + $0x58] sm:$0xff]
        %v503 = vld [vmem:[%s3 + $0x60] sm:$0xff]
        %v504 = vld [vmem:[%s3 + $0x68] sm:$0xff]
        %v505 = vld [vmem:[%s3 + $0x70] sm:$0xff]
        %v506 = vld [vmem:[%s3 + $0x78] sm:$0xff]
        %v507 = vld [vmem:[%s3 + $0x80] sm:$0xff]
        %v508 = vld [vmem:[%s3 + $0x88] sm:$0xff]
        %v509 = vld [vmem:[%s3 + $0x90] sm:$0xff]
        %v510 = vld [vmem:[%s3 + $0x98] sm:$0xff]
        %v511 = vld [vmem:[%s3 + $0xa0] sm:$0xff]
        %v512 = vld [vmem:[%s3 + $0xa8] sm:$0xff]
        %v513 = vld [vmem:[%s3 + $0xb0] sm:$0xff]
        %v514 = vld [vmem:[%s3 + $0xb8] sm:$0xff]
        %v515 = vld [vmem:[%s3 + $0xc0] sm:$0xff]
        %v516 = vld [vmem:[%s3 + $0xc8] sm:$0xff]
        %v517 = vld [vmem:[%s3 + $0xd0] sm:$0xff]
        %v518 = vld [vmem:[%s3 + $0xd8] sm:$0xff]
        %v519 = vld [vmem:[%s3 + $0xe0] sm:$0xff]
        %v520 = vld [vmem:[%s3 + $0xe8] sm:$0xff]
        %v521 = vld [vmem:[%s3 + $0xf0] sm:$0xff]
        %v522 = vld [vmem:[%s3 + $0xf8] sm:$0xff]
        %v523 = vld [vmem:[%s3 + $0x100] sm:$0xff]
        %v524 = vld [vmem:[%s3 + $0x108] sm:$0xff]
        %v525 = vld [vmem:[%s3 + $0x110] sm:$0xff]
        %v526 = vld [vmem:[%s3 + $0x118] sm:$0xff]
        %v527 = vld [vmem:[%s3 + $0x120] sm:$0xff]
        %v528 = vld [vmem:[%s3 + $0x128] sm:$0xff]
        %v529 = vld [vmem:[%s3 + $0x130] sm:$0xff]
        %v530 = vld [vmem:[%s3 + $0x138] sm:$0xff]
        %v531 = vld [vmem:[%s3 + $0x140] sm:$0xff]
        %v532 = vld [vmem:[%s3 + $0x148] sm:$0xff]
        %v533 = vld [vmem:[%s3 + $0x150] sm:$0xff]
        %v534 = vld [vmem:[%s3 + $0x158] sm:$0xff]
        %v535 = vld [vmem:[%s3 + $0x160] sm:$0xff]
        %v536 = vld [vmem:[%s3 + $0x168] sm:$0xff]
        %v537 = vld [vmem:[%s3 + $0x170] sm:$0xff]
        %v538 = vld [vmem:[%s3 + $0x178] sm:$0xff]
        %v539 = vld [vmem:[%s4] sm:$0x3]
        %v541 = vperm.slane %v539, 0
        %v542 = vperm.slane %v539, 1
        %v593 = vunpack.c.l.b16 %v491
        %v594 = vunpack.c.h.b16 %v491
        %v595 = vunpack.c.l.b16 %v492
        %v596 = vunpack.c.h.b16 %v492
        %v597 = vunpack.c.l.b16 %v493
        %v598 = vunpack.c.h.b16 %v493
        %v599 = vunpack.c.l.b16 %v494
        %v600 = vunpack.c.h.b16 %v494
        %v601 = vunpack.c.l.b16 %v495
        %v602 = vunpack.c.h.b16 %v495
        %v603 = vunpack.c.l.b16 %v496
        %v604 = vunpack.c.h.b16 %v496
        %v605 = vunpack.c.l.b16 %v497
        %v606 = vunpack.c.h.b16 %v497
        %v607 = vunpack.c.l.b16 %v498
        %v608 = vunpack.c.h.b16 %v498
        %v609 = vunpack.c.l.b16 %v499
        %v610 = vunpack.c.h.b16 %v499
        %v611 = vunpack.c.l.b16 %v500
        %v612 = vunpack.c.h.b16 %v500
        %v613 = vunpack.c.l.b16 %v501
        %v614 = vunpack.c.h.b16 %v501
        %v615 = vunpack.c.l.b16 %v502
        %v616 = vunpack.c.h.b16 %v502
        %v617 = vunpack.c.l.b16 %v503
        %v618 = vunpack.c.h.b16 %v503
        %v619 = vunpack.c.l.b16 %v504
        %v620 = vunpack.c.h.b16 %v504
        %v621 = vunpack.c.l.b16 %v505
        %v622 = vunpack.c.h.b16 %v505
        %v623 = vunpack.c.l.b16 %v506
        %v624 = vunpack.c.h.b16 %v506
        %v625 = vunpack.c.l.b16 %v507
        %v626 = vunpack.c.h.b16 %v507
        %v627 = vunpack.c.l.b16 %v508
        %v628 = vunpack.c.h.b16 %v508
        %v629 = vunpack.c.l.b16 %v509
        %v630 = vunpack.c.h.b16 %v509
        %v631 = vunpack.c.l.b16 %v510
        %v632 = vunpack.c.h.b16 %v510
        %v633 = vunpack.c.l.b16 %v511
        %v634 = vunpack.c.h.b16 %v511
        %v635 = vunpack.c.l.b16 %v512
        %v636 = vunpack.c.h.b16 %v512
        %v637 = vunpack.c.l.b16 %v513
        %v638 = vunpack.c.h.b16 %v513
        %v639 = vunpack.c.l.b16 %v514
        %v640 = vunpack.c.h.b16 %v514
        %v641 = vunpack.c.l.b16 %v515
        %v642 = vunpack.c.h.b16 %v515
        %v643 = vunpack.c.l.b16 %v516
        %v644 = vunpack.c.h.b16 %v516
        %v645 = vunpack.c.l.b16 %v517
        %v646 = vunpack.c.h.b16 %v517
        %v647 = vunpack.c.l.b16 %v518
        %v648 = vunpack.c.h.b16 %v518
        %v649 = vunpack.c.l.b16 %v519
        %v650 = vunpack.c.h.b16 %v519
        %v651 = vunpack.c.l.b16 %v520
        %v652 = vunpack.c.h.b16 %v520
        %v653 = vunpack.c.l.b16 %v521
        %v654 = vunpack.c.h.b16 %v521
        %v655 = vunpack.c.l.b16 %v522
        %v656 = vunpack.c.h.b16 %v522
        %v657 = vunpack.c.l.b16 %v523
        %v658 = vunpack.c.h.b16 %v523
        %v659 = vunpack.c.l.b16 %v524
        %v660 = vunpack.c.h.b16 %v524
        %v661 = vunpack.c.l.b16 %v525
        %v662 = vunpack.c.h.b16 %v525
        %v663 = vunpack.c.l.b16 %v526
        %v664 = vunpack.c.h.b16 %v526
        %v665 = vunpack.c.l.b16 %v527
        %v666 = vunpack.c.h.b16 %v527
        %v667 = vunpack.c.l.b16 %v528
        %v668 = vunpack.c.h.b16 %v528
        %v669 = vunpack.c.l.b16 %v529
        %v670 = vunpack.c.h.b16 %v529
        %v671 = vunpack.c.l.b16 %v530
        %v672 = vunpack.c.h.b16 %v530
        %v673 = vunpack.c.l.b16 %v531
        %v674 = vunpack.c.h.b16 %v531
        %v675 = vunpack.c.l.b16 %v532
        %v676 = vunpack.c.h.b16 %v532
        %v677 = vunpack.c.l.b16 %v533
        %v678 = vunpack.c.h.b16 %v533
        %v679 = vunpack.c.l.b16 %v534
        %v680 = vunpack.c.h.b16 %v534
        %v681 = vunpack.c.l.b16 %v535
        %v682 = vunpack.c.h.b16 %v535
        %v683 = vunpack.c.l.b16 %v536
        %v684 = vunpack.c.h.b16 %v536
        %v685 = vunpack.c.l.b16 %v537
        %v686 = vunpack.c.h.b16 %v537
        %v687 = vunpack.c.l.b16 %v538
        %v688 = vunpack.c.h.b16 %v538
        %v689 = vpack.c.b16 %v595, %v593
        %v690 = vpack.c.b16 %v596, %v594
        %v691 = vpack.c.b16 %v599, %v597
        %v692 = vpack.c.b16 %v600, %v598
        %v693 = vpack.c.b16 %v603, %v601
        %v694 = vpack.c.b16 %v604, %v602
        %v695 = vpack.c.b16 %v607, %v605
        %v696 = vpack.c.b16 %v608, %v606
        %v697 = vpack.c.b16 %v611, %v609
        %v698 = vpack.c.b16 %v612, %v610
        %v699 = vpack.c.b16 %v615, %v613
        %v700 = vpack.c.b16 %v616, %v614
        %v701 = vpack.c.b16 %v619, %v617
        %v702 = vpack.c.b16 %v620, %v618
        %v703 = vpack.c.b16 %v623, %v621
        %v704 = vpack.c.b16 %v624, %v622
        %v705 = vpack.c.b16 %v627, %v625
        %v706 = vpack.c.b16 %v628, %v626
        %v707 = vpack.c.b16 %v631, %v629
        %v708 = vpack.c.b16 %v632, %v630
        %v709 = vpack.c.b16 %v635, %v633
        %v710 = vpack.c.b16 %v636, %v634
        %v711 = vpack.c.b16 %v639, %v637
        %v712 = vpack.c.b16 %v640, %v638
        %v713 = vpack.c.b16 %v643, %v641
        %v714 = vpack.c.b16 %v644, %v642
        %v715 = vpack.c.b16 %v647, %v645
        %v716 = vpack.c.b16 %v648, %v646
        %v717 = vpack.c.b16 %v651, %v649
        %v718 = vpack.c.b16 %v652, %v650
        %v719 = vpack.c.b16 %v655, %v653
        %v720 = vpack.c.b16 %v656, %v654
        %v721 = vpack.c.b16 %v659, %v657
        %v722 = vpack.c.b16 %v660, %v658
        %v723 = vpack.c.b16 %v663, %v661
        %v724 = vpack.c.b16 %v664, %v662
        %v725 = vpack.c.b16 %v667, %v665
        %v726 = vpack.c.b16 %v668, %v666
        %v727 = vpack.c.b16 %v671, %v669
        %v728 = vpack.c.b16 %v672, %v670
        %v729 = vpack.c.b16 %v675, %v673
        %v730 = vpack.c.b16 %v676, %v674
        %v731 = vpack.c.b16 %v679, %v677
        %v732 = vpack.c.b16 %v680, %v678
        %v733 = vpack.c.b16 %v683, %v681
        %v734 = vpack.c.b16 %v684, %v682
        %v735 = vpack.c.b16 %v687, %v685
        %v736 = vpack.c.b16 %v688, %v686
        %785 = vmatpush.bf16.msra.mxu0 %v703
        %786 = vmatpush.bf16.msra.mxu0 %v701
        %787 = vmatpush.bf16.msra.mxu0 %v699
        %788 = vmatpush.bf16.msra.mxu0 %v697
        %789 = vmatpush.bf16.msra.mxu0 %v695
        %790 = vmatpush.bf16.msra.mxu0 %v693
        %791 = vmatpush.bf16.msra.mxu0 %v691
        %792 = vmatpush.bf16.msra.mxu0 %v689
        %793 = vmatmul.bf16.gmra.mxu0 %v488
        %v794 = vpop.f32.mrf.mxu0
        %v795 = vadd.f32 %v541, %v794
        %v796 = vpop.f32.mrf.mxu0
        %v797 = vadd.f32 %v541, %v796
        %798 = vdwg.mxu0
        %799 = vmatpush.bf16.msra.mxu0 %v719
        %800 = vmatpush.bf16.msra.mxu0 %v717
        %801 = vmatpush.bf16.msra.mxu0 %v715
        %802 = vmatpush.bf16.msra.mxu0 %v713
        %803 = vmatpush.bf16.msra.mxu0 %v711
        %804 = vmatpush.bf16.msra.mxu0 %v709
        %805 = vmatpush.bf16.msra.mxu0 %v707
        %806 = vmatpush.bf16.msra.mxu0 %v705
        %807 = vmatmul.bf16.gmra.mxu0 %v489
        %v808 = vpop.f32.mrf.mxu0
        %v809 = vadd.f32 %v795, %v808
        %v810 = vpop.f32.mrf.mxu0
        %v811 = vadd.f32 %v797, %v810
        %812 = vdwg.mxu0
        %813 = vmatpush.bf16.msra.mxu0 %v735
        %814 = vmatpush.bf16.msra.mxu0 %v733
        %815 = vmatpush.bf16.msra.mxu0 %v731
        %816 = vmatpush.bf16.msra.mxu0 %v729
        %817 = vmatpush.bf16.msra.mxu0 %v727
        %818 = vmatpush.bf16.msra.mxu0 %v725
        %819 = vmatpush.bf16.msra.mxu0 %v723
        %820 = vmatpush.bf16.msra.mxu0 %v721
        %821 = vmatmul.bf16.gmra.mxu0 %v490
        %v822 = vpop.f32.mrf.mxu0
        %v823 = vadd.f32 %v809, %v822
        %v824 = vpop.f32.mrf.mxu0
        %v825 = vadd.f32 %v811, %v824
        %826 = vdwg.mxu0
        %827 = vmatpush.bf16.msra.mxu0 %v704
        %828 = vmatpush.bf16.msra.mxu0 %v702
        %829 = vmatpush.bf16.msra.mxu0 %v700
        %830 = vmatpush.bf16.msra.mxu0 %v698
        %831 = vmatpush.bf16.msra.mxu0 %v696
        %832 = vmatpush.bf16.msra.mxu0 %v694
        %833 = vmatpush.bf16.msra.mxu0 %v692
        %834 = vmatpush.bf16.msra.mxu0 %v690
        %835 = vmatmul.bf16.gmra.mxu0 %v488
        %v836 = vpop.f32.mrf.mxu0
        %v837 = vadd.f32 %v542, %v836
        %v838 = vpop.f32.mrf.mxu0
        %v839 = vadd.f32 %v542, %v838
        %840 = vdwg.mxu0
        %841 = vmatpush.bf16.msra.mxu0 %v720
        %842 = vmatpush.bf16.msra.mxu0 %v718
        %843 = vmatpush.bf16.msra.mxu0 %v716
        %844 = vmatpush.bf16.msra.mxu0 %v714
        %845 = vmatpush.bf16.msra.mxu0 %v712
        %846 = vmatpush.bf16.msra.mxu0 %v710
        %847 = vmatpush.bf16.msra.mxu0 %v708
        %848 = vmatpush.bf16.msra.mxu0 %v706
        %849 = vmatmul.bf16.gmra.mxu0 %v489
        %v850 = vpop.f32.mrf.mxu0
        %v851 = vadd.f32 %v837, %v850
        %v852 = vpop.f32.mrf.mxu0
        %v853 = vadd.f32 %v839, %v852
        %854 = vdwg.mxu0
        %855 = vmatpush.bf16.msra.mxu0 %v736
        %856 = vmatpush.bf16.msra.mxu0 %v734
        %857 = vmatpush.bf16.msra.mxu0 %v732
        %858 = vmatpush.bf16.msra.mxu0 %v730
        %859 = vmatpush.bf16.msra.mxu0 %v728
        %860 = vmatpush.bf16.msra.mxu0 %v726
        %861 = vmatpush.bf16.msra.mxu0 %v724
        %862 = vmatpush.bf16.msra.mxu0 %v722
        %863 = vmatmul.bf16.gmra.mxu0 %v490
        %v864 = vpop.f32.mrf.mxu0
        %v865 = vadd.f32 %v851, %v864
        %v866 = vpop.f32.mrf.mxu0
        %v867 = vadd.f32 %v853, %v866
        %868 = vdwg.mxu0
        %v869 = vmax.f32 %v823, 0.0
        %v870 = vmax.f32 %v825, 0.0
        %v873 = vrot.slane %v869, 7
        %v874 = vrot.slane %v870, 7
        %v875 = vsel %vm318, %v873, %v874
        %v878 = vsel %vm318, 0.0, %v873
        %v879 = vrot.slane %v869, 1
        %v880 = vrot.slane %v870, 1
        %v881 = vsel %vm325, %v879, %v880
        %v884 = vsel %vm325, %v880, 0.0
        %v885 = vpack.c.bf16 %v875, %v878
        %v886 = vpack.c.bf16 %v870, %v869
        %v887 = vpack.c.bf16 %v884, %v881
        %v888 = vld [vmem:[#allocation4] sm:$0xf]
        %v889 = vld [vmem:[#allocation4 + $0x4] sm:$0xf]
        %v890 = vld [vmem:[#allocation4 + $0x8] sm:$0xf]
        %v891 = vld [vmem:[#allocation4 + $0xc] sm:$0xf]
        %v892 = vld [vmem:[#allocation4 + $0x10] sm:$0xf]
        %v893 = vld [vmem:[#allocation4 + $0x14] sm:$0xf]
        %v894 = vld [vmem:[#allocation4 + $0x18] sm:$0xf]
        %v895 = vld [vmem:[#allocation4 + $0x1c] sm:$0xf]
        %v896 = vld [vmem:[#allocation4 + $0x20] sm:$0xf]
        %v897 = vld [vmem:[#allocation4 + $0x24] sm:$0xf]
        %v898 = vld [vmem:[#allocation4 + $0x28] sm:$0xf]
        %v899 = vld [vmem:[#allocation4 + $0x2c] sm:$0xf]
        %v900 = vld [vmem:[#allocation4 + $0x30] sm:$0xf]
        %v901 = vld [vmem:[#allocation4 + $0x34] sm:$0xf]
        %v902 = vld [vmem:[#allocation4 + $0x38] sm:$0xf]
        %v903 = vld [vmem:[#allocation4 + $0x3c] sm:$0xf]
        %v904 = vld [vmem:[#allocation4 + $0x40] sm:$0xf]
        %v905 = vld [vmem:[#allocation4 + $0x44] sm:$0xf]
        %v906 = vld [vmem:[#allocation4 + $0x48] sm:$0xf]
        %v907 = vld [vmem:[#allocation4 + $0x4c] sm:$0xf]
        %v908 = vld [vmem:[#allocation4 + $0x50] sm:$0xf]
        %v909 = vld [vmem:[#allocation4 + $0x54] sm:$0xf]
        %v910 = vld [vmem:[#allocation4 + $0x58] sm:$0xf]
        %v911 = vld [vmem:[#allocation4 + $0x5c] sm:$0xf]
        %v912 = vld [vmem:[#allocation4 + $0x60] sm:$0xf]
        %v913 = vld [vmem:[#allocation4 + $0x64] sm:$0xf]
        %v914 = vld [vmem:[#allocation4 + $0x68] sm:$0xf]
        %v915 = vld [vmem:[#allocation4 + $0x6c] sm:$0xf]
        %v916 = vld [vmem:[#allocation4 + $0x70] sm:$0xf]
        %v917 = vld [vmem:[#allocation4 + $0x74] sm:$0xf]
        %v918 = vld [vmem:[#allocation4 + $0x78] sm:$0xf]
        %v919 = vld [vmem:[#allocation4 + $0x7c] sm:$0xf]
        %v920 = vld [vmem:[#allocation4 + $0x80] sm:$0xf]
        %v921 = vld [vmem:[#allocation4 + $0x84] sm:$0xf]
        %v922 = vld [vmem:[#allocation4 + $0x88] sm:$0xf]
        %v923 = vld [vmem:[#allocation4 + $0x8c] sm:$0xf]
        %v924 = vld [vmem:[#allocation4 + $0x90] sm:$0xf]
        %v925 = vld [vmem:[#allocation4 + $0x94] sm:$0xf]
        %v926 = vld [vmem:[#allocation4 + $0x98] sm:$0xf]
        %v927 = vld [vmem:[#allocation4 + $0x9c] sm:$0xf]
        %v928 = vld [vmem:[#allocation4 + $0xa0] sm:$0xf]
        %v929 = vld [vmem:[#allocation4 + $0xa4] sm:$0xf]
        %v930 = vld [vmem:[#allocation4 + $0xa8] sm:$0xf]
        %v931 = vld [vmem:[#allocation4 + $0xac] sm:$0xf]
        %v932 = vld [vmem:[#allocation4 + $0xb0] sm:$0xf]
        %v933 = vld [vmem:[#allocation4 + $0xb4] sm:$0xf]
        %v934 = vld [vmem:[#allocation4 + $0xb8] sm:$0xf]
        %v935 = vld [vmem:[#allocation4 + $0xbc] sm:$0xf]
        %v936 = vld [vmem:[%s6] sm:$0x1]
        %v938 = vperm.slane %v936, 0
        %v988 = vunpack.c.l.b16 %v888
        %v989 = vunpack.c.l.b16 %v889
        %v990 = vunpack.c.l.b16 %v890
        %v991 = vunpack.c.l.b16 %v891
        %v992 = vunpack.c.l.b16 %v892
        %v993 = vunpack.c.l.b16 %v893
        %v994 = vunpack.c.l.b16 %v894
        %v995 = vunpack.c.l.b16 %v895
        %v996 = vunpack.c.l.b16 %v896
        %v997 = vunpack.c.l.b16 %v897
        %v998 = vunpack.c.l.b16 %v898
        %v999 = vunpack.c.l.b16 %v899
        %v1000 = vunpack.c.l.b16 %v900
        %v1001 = vunpack.c.l.b16 %v901
        %v1002 = vunpack.c.l.b16 %v902
        %v1003 = vunpack.c.l.b16 %v903
        %v1004 = vunpack.c.l.b16 %v904
        %v1005 = vunpack.c.l.b16 %v905
        %v1006 = vunpack.c.l.b16 %v906
        %v1007 = vunpack.c.l.b16 %v907
        %v1008 = vunpack.c.l.b16 %v908
        %v1009 = vunpack.c.l.b16 %v909
        %v1010 = vunpack.c.l.b16 %v910
        %v1011 = vunpack.c.l.b16 %v911
        %v1012 = vunpack.c.l.b16 %v912
        %v1013 = vunpack.c.l.b16 %v913
        %v1014 = vunpack.c.l.b16 %v914
        %v1015 = vunpack.c.l.b16 %v915
        %v1016 = vunpack.c.l.b16 %v916
        %v1017 = vunpack.c.l.b16 %v917
        %v1018 = vunpack.c.l.b16 %v918
        %v1019 = vunpack.c.l.b16 %v919
        %v1020 = vunpack.c.l.b16 %v920
        %v1021 = vunpack.c.l.b16 %v921
        %v1022 = vunpack.c.l.b16 %v922
        %v1023 = vunpack.c.l.b16 %v923
        %v1024 = vunpack.c.l.b16 %v924
        %v1025 = vunpack.c.l.b16 %v925
        %v1026 = vunpack.c.l.b16 %v926
        %v1027 = vunpack.c.l.b16 %v927
        %v1028 = vunpack.c.l.b16 %v928
        %v1029 = vunpack.c.l.b16 %v929
        %v1030 = vunpack.c.l.b16 %v930
        %v1031 = vunpack.c.l.b16 %v931
        %v1032 = vunpack.c.l.b16 %v932
        %v1033 = vunpack.c.l.b16 %v933
        %v1034 = vunpack.c.l.b16 %v934
        %v1035 = vunpack.c.l.b16 %v935
        %v1036 = vpack.c.b16 %v989, %v988
        %v1037 = vpack.c.b16 %v991, %v990
        %v1038 = vpack.c.b16 %v993, %v992
        %v1039 = vpack.c.b16 %v995, %v994
        %v1040 = vpack.c.b16 %v997, %v996
        %v1041 = vpack.c.b16 %v999, %v998
        %v1042 = vpack.c.b16 %v1001, %v1000
        %v1043 = vpack.c.b16 %v1003, %v1002
        %v1044 = vpack.c.b16 %v1005, %v1004
        %v1045 = vpack.c.b16 %v1007, %v1006
        %v1046 = vpack.c.b16 %v1009, %v1008
        %v1047 = vpack.c.b16 %v1011, %v1010
        %v1048 = vpack.c.b16 %v1013, %v1012
        %v1049 = vpack.c.b16 %v1015, %v1014
        %v1050 = vpack.c.b16 %v1017, %v1016
        %v1051 = vpack.c.b16 %v1019, %v1018
        %v1052 = vpack.c.b16 %v1021, %v1020
        %v1053 = vpack.c.b16 %v1023, %v1022
        %v1054 = vpack.c.b16 %v1025, %v1024
        %v1055 = vpack.c.b16 %v1027, %v1026
        %v1056 = vpack.c.b16 %v1029, %v1028
        %v1057 = vpack.c.b16 %v1031, %v1030
        %v1058 = vpack.c.b16 %v1033, %v1032
        %v1059 = vpack.c.b16 %v1035, %v1034
        %1084 = vmatpush.bf16.msra.mxu0 %v1043
        %1085 = vmatpush.bf16.msra.mxu0 %v1042
        %1086 = vmatpush.bf16.msra.mxu0 %v1041
        %1087 = vmatpush.bf16.msra.mxu0 %v1040
        %1088 = vmatpush.bf16.msra.mxu0 %v1039
        %1089 = vmatpush.bf16.msra.mxu0 %v1038
        %1090 = vmatpush.bf16.msra.mxu0 %v1037
        %1091 = vmatpush.bf16.msra.mxu0 %v1036
        %1092 = vmatmul.bf16.gmra.mxu0 %v885
        %v1093 = vpop.f32.mrf.mxu0
        %v1094 = vadd.f32 %v938, %v1093
        %v1095 = vpop.f32.mrf.mxu0
        %v1096 = vadd.f32 %v938, %v1095
        %1097 = vdwg.mxu0
        %1098 = vmatpush.bf16.msra.mxu0 %v1051
        %1099 = vmatpush.bf16.msra.mxu0 %v1050
        %1100 = vmatpush.bf16.msra.mxu0 %v1049
        %1101 = vmatpush.bf16.msra.mxu0 %v1048
        %1102 = vmatpush.bf16.msra.mxu0 %v1047
        %1103 = vmatpush.bf16.msra.mxu0 %v1046
        %1104 = vmatpush.bf16.msra.mxu0 %v1045
        %1105 = vmatpush.bf16.msra.mxu0 %v1044
        %1106 = vmatmul.bf16.gmra.mxu0 %v886
        %v1107 = vpop.f32.mrf.mxu0
        %v1108 = vadd.f32 %v1094, %v1107
        %v1109 = vpop.f32.mrf.mxu0
        %v1110 = vadd.f32 %v1096, %v1109
        %1111 = vdwg.mxu0
        %1112 = vmatpush.bf16.msra.mxu0 %v1059
        %1113 = vmatpush.bf16.msra.mxu0 %v1058
        %1114 = vmatpush.bf16.msra.mxu0 %v1057
        %1115 = vmatpush.bf16.msra.mxu0 %v1056
        %1116 = vmatpush.bf16.msra.mxu0 %v1055
        %1117 = vmatpush.bf16.msra.mxu0 %v1054
        %1118 = vmatpush.bf16.msra.mxu0 %v1053
        %1119 = vmatpush.bf16.msra.mxu0 %v1052
        %1120 = vmatmul.bf16.gmra.mxu0 %v887
        %v1121 = vpop.f32.mrf.mxu0
        %v1122 = vadd.f32 %v1108, %v1121
        %v1123 = vpop.f32.mrf.mxu0
        %v1124 = vadd.f32 %v1110, %v1123
        %1125 = vdwg.mxu0
        %v1126 = vadd.f32 %v1122, %v865
        %v1127 = vadd.f32 %v1124, %v867
        %1128 = vst [vmem:[%s312] sm:$0xff] %v1126
        %1129 = vst [vmem:[%s312 + $0x8] sm:$0xff] %v1127
        %p1130 = scmp.lt.s32.totalorder %s20, 1
        %s1131 = scalar_select %p1130, %s20, 1
        %s1132 = smul.addr %s1131, 2
        %s1133 = smul.addr %s1132, 8
        %s1134 = scalar_lea.vmem %s7, %s1133
        // Predicated region
        $region57: #{edge_block.1} parent=47 // pred_check
          %p1135 = pneg %p190
        $region58: #{edge_block.1} parent=47 // pred_check_branch
          %1137 = sbr.rel (%p1135) target = $region60
        $region59: #{edge_block.1} parent=47 // pred_region
          _
        $region60: #{edge_block.1} parent=47 // pred_fallthru
          _
      $region48: #{edge_block.1} parent=5 // pred_fallthru
        _
      %p1138 = scmp.le.s32.totalorder 2, %s15
      // Predicated region
      $region61: #{edge_block.1} parent=5 // pred_check
        %p1139 = pneg %p1138
      $region62: #{edge_block.1} parent=5 // pred_check_branch
        %1141 = sbr.rel (%p1139) target = $region64
      $region63: #{edge_block.1} parent=5 // pred_region
        %s1142 = ssub.s32 %s15, 2
        // Predicated region
        $region65: #{edge_block.1} parent=63 // pred_check
          %p1143 = pneg %p196
        $region66: #{edge_block.1} parent=63 // pred_check_branch
          %1145 = sbr.rel (%p1143) target = $region68
        $region67: #{edge_block.1} parent=63 // pred_region
          %p1146 = scmp.lt.s32.totalorder %s21, 1
          %s1147 = scalar_select %p1146, %s21, 1
          %s1148 = smul.addr %s1147, 2
          %s1149 = smul.addr %s1148, 8
          %s1150 = scalar_lea.vmem %s7, %s1149
        $region68: #{edge_block.1} parent=63 // pred_fallthru
          _
      $region64: #{edge_block.1} parent=5 // pred_fallthru
        _
    $region6: #{edge_block.1} parent=1 // loop_footer
      %s19 = sadd.s32 1, %s15
    $region7: #{edge_block.1} parent=1 // loop_footer_branch
      %14 = sbr.rel target = $region3
    $region8: #{edge_block.1} parent=1 // loop_exit
      _
    %1151 = vsyncpa [#allocation3], 1
    %s1152 = scalar_lea.sflag [#allocation3], 1
    %1153 = vsyncpa %s1152, 1
    %1154 = vsyncpa [#allocation5], 1

</llo_original>
